<compile_context>
chip_gen: v6e
topology: v6e:2x2x1
jax: 0.10.0
libtpu: 0.0.40
codegen_flags: <defaults>
</compile_context>

<pallas_src>
import jax
import jax.numpy as jnp
from jax.experimental import pallas as pl
from jax.experimental.pallas import tpu as pltpu

_LANES = 128


# ---------------------------------------------------------------------------
# Kernel 1: mean cross-entropy over the batch (single VMEM block).
# ---------------------------------------------------------------------------
def _ce_kernel(logits_ref, targets_ref, loss_ref):
    logits = logits_ref[...]                                          # (B, C) f32
    tgt = targets_ref[...]                                            # (B, 1) i32
    B, C = logits.shape
    row_max = jnp.max(logits, axis=-1, keepdims=True)                 # (B, 1)
    lse = jnp.log(jnp.sum(jnp.exp(logits - row_max), axis=-1,
                          keepdims=True)) + row_max                   # (B, 1)
    col = jax.lax.broadcasted_iota(jnp.int32, (B, C), 1)              # (B, C)
    picked = jnp.sum(jnp.where(col == tgt, logits, 0.0),
                     axis=-1, keepdims=True)                          # (B, 1)
    loss_ref[...] = jnp.sum(lse - picked, axis=0, keepdims=True) / B  # (1, 1)


def cross_entropy_mean(logits, targets):
    B = logits.shape[0]
    out = pl.pallas_call(
        _ce_kernel,
        out_shape=jax.ShapeDtypeStruct((1, 1), jnp.float32),
        in_specs=[pl.BlockSpec(memory_space=pltpu.MemorySpace.VMEM),
                  pl.BlockSpec(memory_space=pltpu.MemorySpace.VMEM)],
        out_specs=pl.BlockSpec(memory_space=pltpu.MemorySpace.VMEM),
    )(logits.astype(jnp.float32), targets.reshape(B, 1).astype(jnp.int32))
    return out[0, 0]


# ---------------------------------------------------------------------------
# Kernel 2: fused per-layer activation statistics for all conv layers sharing
# one input. Single invocation per group: conv via KH shifted MXU matmuls on the
# resident input, global per-channel max, divide-free threshold counts, and the
# per-layer ratio reduction as one matmul against a pre-scaled group matrix.
# ---------------------------------------------------------------------------
def _make_group_stats_kernel(n_imgs, hp, h, w, kh):
    hw = h * w

    def kernel(pj_ref, w_ref, g_ref, out_ref):
        # --- conv: accumulate KH shifted (P, KW*Cin) @ (KW*Cin, cout_pad) ---
        act = None
        for ki in range(kh):                                          # static unroll
            parts = [pj_ref[pl.ds(n * hp * w + ki * w, hw), :]        # (H*W, KW*Cin)
                     for n in range(n_imgs)]
            slab = parts[0] if n_imgs == 1 else jnp.concatenate(parts, axis=0)
            contrib = jnp.dot(slab, w_ref[ki],
                              preferred_element_type=jnp.float32)     # (P, cout_pad) f32
            act = contrib if act is None else act + contrib

        # --- pass 0: per-output-channel max; clamp at 0 replaces the ReLU ---
        cmax = jnp.maximum(jnp.max(act, axis=0, keepdims=True), 0.0)  # (1, cout_pad)
        thr = cmax + 1e-12

        # --- pass 1 on the same resident data: divide-free threshold counts ---
        # act/(cmax+eps) > x  <=>  act > x*(cmax+eps)   (thresholds > 0)
        hi = jnp.sum((act > 0.9 * thr).astype(jnp.float32),
                     axis=0, keepdims=True)                           # (1, cout_pad)
        lo = jnp.sum((act > 0.1 * thr).astype(jnp.float32),
                     axis=0, keepdims=True)                           # (1, cout_pad)

        # --- per-layer ratios via one matmul each against the scaled group matrix ---
        out_ref[...] = jnp.concatenate(
            [jnp.dot(hi, g_ref[...], preferred_element_type=jnp.float32),
             jnp.dot(lo, g_ref[...], preferred_element_type=jnp.float32)],
            axis=0)                                                   # (2, 128)

    return kernel


def _expand_kw(x_nhwc, kh, kw):
    """Horizontal-window expansion only (KW x, not KH*KW x like im2col).

    Rows are indexed by (n, padded-row hp, output-col w); lanes by (kj, cin).
    Vertical offsets ki are applied in-kernel by sublane slicing.
    """
    N, H, W, C = x_nhwc.shape
    ph, pw = kh // 2, kw // 2
    xp = jnp.pad(x_nhwc, ((0, 0), (ph, ph), (pw, pw), (0, 0)))        # (N, Hp, Wp, C)
    cols = [xp[:, :, j:j + W, :] for j in range(kw)]                  # (N, Hp, W, C) each
    pj = jnp.stack(cols, axis=-2)                                     # (N, Hp, W, KW, C)
    hp = H + 2 * ph
    return pj.reshape(N * hp * W, kw * C), hp


def fused_group_layer_ratios(x_nhwc, weight_list):
    """All conv layers in `weight_list` (layout (KH, KW, Cin, Cout)) share `x_nhwc`.

    Returns (hi_ratios, lo_ratios), each of shape (num_layers,): per-layer fraction
    of max-normalized activations above 0.9 / 0.1.
    """
    kh, kw, cin, _ = weight_list[0].shape
    couts = [int(wt.shape[3]) for wt in weight_list]
    num_layers = len(couts)
    cout_total = sum(couts)
    cout_pad = max(_LANES, ((cout_total + _LANES - 1) // _LANES) * _LANES)
    N, H, W, C = x_nhwc.shape
    assert C == cin, "group input channels must match the conv weights"
    P = N * H * W

    # Input: only KW-fold expansion, bf16 (halves DMA); compact lane dim in HBM.
    pj, hp = _expand_kw(x_nhwc.astype(jnp.bfloat16), kh, kw)          # (N*Hp*W, KW*Cin)

    # Fused weights (KH, KW*Cin, cout_pad); zero-padded channels are inert
    # (cmax clamps to 0 -> counts 0, and the group matrix zeroes them anyway).
    w_f = jnp.concatenate([wt.astype(jnp.float32) for wt in weight_list], axis=3)
    w_f = jnp.pad(w_f, ((0, 0), (0, 0), (0, 0), (0, cout_pad - cout_total)))
    w_f = w_f.reshape(kh, kw * cin, cout_pad).astype(jnp.bfloat16)

    # Scaled group matrix: counts @ g == per-layer ratios (one matmul, no ragged loop).
    g = jnp.zeros((cout_pad, _LANES), jnp.float32)
    off = 0
    for layer_idx, c in enumerate(couts):
        g = g.at[off:off + c, layer_idx].set(1.0 / (float(P) * float(c)))
        off += c

    kernel = _make_group_stats_kernel(N, hp, H, W, kh)
    out = pl.pallas_call(
        kernel,
        out_shape=jax.ShapeDtypeStruct((2, _LANES), jnp.float32),
        in_specs=[pl.BlockSpec(memory_space=pltpu.MemorySpace.VMEM)] * 3,
        out_specs=pl.BlockSpec(memory_space=pltpu.MemorySpace.VMEM),
        # Explicit budget valid on every generation (v5e 16 MiB scoped default,
        # v6e 32/128 MiB, v7x 32/64 MiB); demo-sized inputs use only a few hundred KiB.
        compiler_params=pltpu.CompilerParams(vmem_limit_bytes=32 * 1024 * 1024),
    )(pj, w_f, g)

    return out[0, :num_layers], out[1, :num_layers]


# ---------------------------------------------------------------------------
# MetricBaseLoss.forward
# ---------------------------------------------------------------------------
def metric_base_loss(predictions, targets, rgb_layers, gray_layers, images_nchw,
                     each_channel_max_weight=1.0, min_weight=1.0):
    base_loss = cross_entropy_mean(predictions, targets)

    # images.requires_grad_() has no JAX analogue needed (grads come via jax.grad).
    images_nhwc = jnp.transpose(images_nchw, (0, 2, 3, 1))            # NCHW -> NHWC
    # TODO(synk): unweighted channel mean; swap for luminance weights if the
    # PyTorch pipeline uses a proper grayscale conversion.
    gray = jnp.mean(images_nhwc, axis=-1, keepdims=True)

    hi_list, lo_list = [], []
    rgb_used = rgb_layers[1:]                                         # without_RGBConv0=True
    if rgb_used:
        hi, lo = fused_group_layer_ratios(images_nhwc, rgb_used)
        hi_list.append(hi)
        lo_list.append(lo)
    if gray_layers:
        hi, lo = fused_group_layer_ratios(gray, gray_layers)
        hi_list.append(hi)
        lo_list.append(lo)

    max_loss = jnp.mean(jnp.concatenate(hi_list))  # 避免高效反應 (ratio_above_0.9 < 20%)
    min_loss = jnp.mean(jnp.concatenate(lo_list))  # 避免低效反應 (ratio_above_0.1 > 1%)

    return base_loss - max_loss * each_channel_max_weight - min_loss * min_weight


if __name__ == "__main__":
    key = jax.random.PRNGKey(0)
    k_pred, k_img, k_w0, k_w1, k_w2, k_w3, k_w4 = jax.random.split(key, 7)

    # Small shapes consistent with the forward pass.
    B, num_classes = 4, 8
    N, H, W = 2, 16, 16

    predictions = jax.random.normal(k_pred, (B, num_classes), jnp.float32)
    targets = jnp.array([0, 2, 1, 3], dtype=jnp.int32)
    images = jax.random.uniform(k_img, (N, 3, H, W), jnp.float32)     # NCHW like PyTorch

    # Deterministic synthetic conv filters, layout (KH, KW, Cin, Cout).
    rgb_layers = [
        0.2 * jax.random.normal(k_w0, (3, 3, 3, 4), jnp.float32),     # skipped (RGBConv0)
        0.2 * jax.random.normal(k_w1, (3, 3, 3, 8), jnp.float32),
        0.2 * jax.random.normal(k_w2, (3, 3, 3, 16), jnp.float32),
    ]
    gray_layers = [
        0.2 * jax.random.normal(k_w3, (3, 3, 1, 8), jnp.float32),
        0.2 * jax.random.normal(k_w4, (3, 3, 1, 4), jnp.float32),
    ]

    total = metric_base_loss(predictions, targets, rgb_layers, gray_layers, images)
    total = jax.block_until_ready(total)
    assert jnp.isfinite(total)
    print("KERNEL_OK")
</pallas_src>

<mosaic_0001>
module attributes {stable_mosaic.version = 11 : i64} {
  func.func @_ce_kernel(%arg0: memref<4x8xf32, #tpu.memory_space<vmem>>, %arg1: memref<4x1xi32, #tpu.memory_space<vmem>>, %arg2: memref<1x1xf32, #tpu.memory_space<vmem>>) attributes {dimension_semantics = [], scalar_prefetch = 0 : i64, scratch_operands = 0 : i64, tpu.core_type = #tpu.core_type<tc>} {
    %c0 = arith.constant 0 : index
    %c0_0 = arith.constant 0 : index
    %0 = vector.load %arg0[%c0, %c0_0] : memref<4x8xf32, #tpu.memory_space<vmem>>, vector<4x8xf32>
    %c0_1 = arith.constant 0 : index
    %c0_2 = arith.constant 0 : index
    %1 = vector.load %arg1[%c0_1, %c0_2] : memref<4x1xi32, #tpu.memory_space<vmem>>, vector<4x1xi32>
    %cst = arith.constant dense<0xFF800000> : vector<4xf32>
    %2 = vector.multi_reduction <maximumf>, %0, %cst [1] : vector<4x8xf32> to vector<4xf32>
    %3 = vector.shape_cast %2 : vector<4xf32> to vector<4x1xf32>
    %4 = vector.broadcast %3 : vector<4x1xf32> to vector<4x8xf32>
    %5 = arith.subf %0, %4 : vector<4x8xf32>
    %6 = math.exp %5 : vector<4x8xf32>
    %cst_3 = arith.constant dense<0.000000e+00> : vector<4xf32>
    %7 = vector.multi_reduction <add>, %6, %cst_3 [1] : vector<4x8xf32> to vector<4xf32>
    %8 = vector.shape_cast %7 : vector<4xf32> to vector<4x1xf32>
    %9 = math.log %8 : vector<4x1xf32>
    %10 = arith.addf %9, %3 : vector<4x1xf32>
    %11 = tpu.iota {dimensions = array<i32: 1>} : vector<4x8xi32>
    %12 = vector.broadcast %1 : vector<4x1xi32> to vector<4x8xi32>
    %13 = arith.cmpi eq, %11, %12 : vector<4x8xi32>
    %cst_4 = arith.constant 0.000000e+00 : f32
    %14 = vector.broadcast %cst_4 : f32 to vector<4x8xf32>
    %15 = arith.select %13, %0, %14 : vector<4x8xi1>, vector<4x8xf32>
    %cst_5 = arith.constant dense<0.000000e+00> : vector<4xf32>
    %16 = vector.multi_reduction <add>, %15, %cst_5 [1] : vector<4x8xf32> to vector<4xf32>
    %17 = vector.shape_cast %16 : vector<4xf32> to vector<4x1xf32>
    %18 = arith.subf %10, %17 : vector<4x1xf32>
    %cst_6 = arith.constant dense<0.000000e+00> : vector<1xf32>
    %19 = vector.multi_reduction <add>, %18, %cst_6 [0] : vector<4x1xf32> to vector<1xf32>
    %20 = vector.shape_cast %19 : vector<1xf32> to vector<1x1xf32>
    %cst_7 = arith.constant 4.000000e+00 : f32
    %21 = vector.broadcast %cst_7 : f32 to vector<1x1xf32>
    %22 = arith.divf %20, %21 : vector<1x1xf32>
    %c0_8 = arith.constant 0 : index
    %c0_9 = arith.constant 0 : index
    %23 = vector.load %arg2[%c0_8, %c0_9] : memref<1x1xf32, #tpu.memory_space<vmem>>, vector<1x1xf32>
    tpu.vector_store %arg2[%c0_8, %c0_9], %22 {strides = array<i32>} : memref<1x1xf32, #tpu.memory_space<vmem>>, vector<1x1xf32>,
    return
  }
}

</mosaic_0001>

<llo_original>
// kernel: tpu_custom_call.1
$region0: #{tpu_custom_call.1}
  #allocation0 [shape = 'u32[]', space=smem, size = 0x4, offset = 0x4, fixed_abs, tag = 'smem constant byte address 0x4 - core index']
  #allocation1 [shape = 'u32[144,128]{1,0:T(1,128)}', space=vmem, size = 0x12000, scoped, tag = 'internal scratch']
  %s0 = inlined_call_operand.vmem [shape: f32[4,8], index: 0, kind: input, shape index: {}]
  %s1 = inlined_call_operand.vmem [shape: s32[4,1], index: 1, kind: input, shape index: {}]
  %s2 = inlined_call_operand.hbm [shape: f32[1,1], index: 2, kind: output, shape index: {}]
  %s3 = sld [smem:[#allocation0]]
  $region18: #{tpu_custom_call.1} parent=0
    _
  %s5 = ssub.s32 1, %s3
  %s6 = scalar_select 0, %s5, %s3
  $region1: #{tpu_custom_call.1} parent=0
    #allocation2 [shape = 'u8[512]{0}', space=vmem, size = 0x400, scoped, tag = 'output window, operand 0, single buffered']
    #allocation3 [shape = 's32[1]{0}', space=sflag, size = 0x4, scoped, tag = 'scoped memory for tpu_custom_call.1']
    %7 = vsyncpa [#allocation3], 0
    // Predicated region
    $region2: #{tpu_custom_call.1} parent=1 // pred_check
      _
    $region3: #{tpu_custom_call.1} parent=1 // pred_check_branch
      %9 = sbr.rel (0) target = $region5
    $region4: #{tpu_custom_call.1} parent=1 // pred_region
      _
    $region5: #{tpu_custom_call.1} parent=1 // pred_fallthru
      _
    // Predicated region
    $region6: #{tpu_custom_call.1} parent=1 // pred_check
      _
    $region7: #{tpu_custom_call.1} parent=1 // pred_check_branch
      %11 = sbr.rel (0) target = $region9
    $region8: #{tpu_custom_call.1} parent=1 // pred_region
      _
    $region9: #{tpu_custom_call.1} parent=1 // pred_fallthru
      _
    %v12 = vld [vmem:[%s0] sm:$0xf]
    %v13 = vld [vmem:[%s1] sm:$0xf]
    %vm14 = vcmask 60416
    %v15 = vsel %vm14, %v12, -inf
    %16 = vmax.xlane.f32.xlu0 %v15
    %v17 = vpop.xlane.xlu0 %16
    %v18 = vsub.f32 %v12, %v17
    %v19 = vmul.f32 %v18, 1.442695
    %v20 = vpow.pop %v19
    %v21 = vsel %vm14, %v20, 0.0
    %22 = vadd.xlane.f32.xlu0 %v21
    %v23 = vpop.xlane.xlu0 %22
    %v24 = vlog2.pop %v23
    %v25 = vmul.f32 %v24, 0.6931472
    %v26 = vadd.f32 %v25, %v17
    %v27 = vlaneseq
    %v28 = vand.u32 %v27, 127
    %29 = vset.pattern.permute.xlu0 0
    %30 = vperm.xlu0 %29, %v13
    %v31 = vpop.permute.xlu0 %30
    %vm32 = vcmp.eq.s32.totalorder %v28, %v31
    %v33 = vsel %vm32, %v12, 0.0
    %v34 = vsel %vm14, %v33, 0.0
    %35 = vadd.xlane.f32.xlu0 %v34
    %v36 = vpop.xlane.xlu0 %35
    %v37 = vsub.f32 %v26, %v36
    %vm38 = vcmask 1043456
    %v39 = vsel %vm38, %v37, 0.0
    %v40 = vrot.slane %v39, 4
    %v41 = vadd.f32 %v39, %v40
    %v42 = vrot.slane %v41, 2
    %v43 = vadd.f32 %v41, %v42
    %v44 = vrot.slane %v43, 1
    %v45 = vadd.f32 %v43, %v44
    %v46 = vrcp.pop 4.0
    %v47 = vmul.f32 %v45, %v46
    %vm48 = vcmask 0
    %49 = vst.msk [vmem:[#allocation2] sm:$0x1] %vm48, %v47
    // Predicated region
    $region10: #{tpu_custom_call.1} parent=1 // pred_check
      _
    $region11: #{tpu_custom_call.1} parent=1 // pred_check_branch
      %51 = sbr.rel (0) target = $region13
    $region12: #{tpu_custom_call.1} parent=1 // pred_region
      %s53 = ssub.s32 16, 16
      %54 = vsyncadd [#allocation3], %s53
      %s56 = sshll.u32 [#allocation2], 4
      %s57 = int_to_ptr.vmem [resolvable:$true] %s56
      %59 = dma.vmem_to_hbm [thread:$0]  %s57, 16, %s2, [#allocation3]
    $region13: #{tpu_custom_call.1} parent=1 // pred_fallthru
      _
    // Predicated region
    $region14: #{tpu_custom_call.1} parent=1 // pred_check
      _
    $region15: #{tpu_custom_call.1} parent=1 // pred_check_branch
      %61 = sbr.rel (0) target = $region17
    $region16: #{tpu_custom_call.1} parent=1 // pred_region
      %62 = dma.done [#allocation3], 16
    $region17: #{tpu_custom_call.1} parent=1 // pred_fallthru
      _
    %63 = vsyncpa [#allocation3], 1

</llo_original>
